<compile_context>
chip_gen: v7x
topology: tpu7x:2x2x1
jax: 0.10.0
libtpu: 0.0.40
codegen_flags: <defaults>
</compile_context>

<pallas_src>
import functools

import jax
import jax.numpy as jnp
from jax.experimental import pallas as pl
from jax.experimental.pallas import tpu as pltpu


# ----------------------------- small helpers -------------------------------


def _tpu_backend():
    try:
        return jax.devices()[0].platform == "tpu"
    except Exception:
        return False


def _num_tensorcores():
    """TensorCores per chip: 2 on v7x, 1 on v5e/v6e (and non-TPU backends)."""
    try:
        d = jax.devices()[0]
        if d.platform != "tpu":
            return 1
        kind = str(getattr(d, "device_kind", "")).lower()
        if "v7" in kind or "tpu7" in kind or "7x" in kind:
            return 2
    except Exception:
        pass
    return 1


def _dropout_thresh(dropout_p):
    # Drop prob is round(p * 2^32) / 2^32 (negligible ~2^-32 bias); the clamp
    # means p == 1.0 cannot drop literally everything (keep prob 2^-32).
    return jnp.uint32(min(int(round(dropout_p * 4294967296.0)), 0xFFFFFFFF))


# --------------------------------- kernels ----------------------------------


def _eval_kernel(pos_ref, x_ref, o_ref):
    """Pure-bandwidth path: [pos | x] written directly into the output tile."""
    o_ref[:, 1:] = x_ref[...]
    o_ref[:, 0:1] = pos_ref[...].astype(o_ref.dtype)


def _dropout_hw_kernel(seed_ref, pos_ref, x_ref, o_ref, *, dropout_p):
    """Training path on real TPU: fused inverted dropout via the HW PRNG.

    TODO(synk): torch's nn.Dropout RNG stream cannot be reproduced bitwise; the
    TPU hardware PRNG is used with identical keep-prob and 1/(1-p) scaling.
    The seed is offset by program_id, so the mask pattern also depends on
    block_rows (not tiling-invariant).
    """
    R, E = x_ref.shape
    pltpu.prng_seed(seed_ref[0] + pl.program_id(0))
    thresh = _dropout_thresh(dropout_p)
    scale = jnp.float32(1.0 / (1.0 - dropout_p))

    # Fused mask + scale in a single select; scale stays in f32 until the cast.
    bits_x = pltpu.bitcast(pltpu.prng_random_bits((R, E)), jnp.uint32)
    o_ref[:, 1:] = jnp.where(
        bits_x >= thresh, x_ref[...].astype(jnp.float32) * scale,
        jnp.float32(0.0)).astype(o_ref.dtype)

    # Lane-aligned draw for the pos column; only lane 0 is consumed.
    bits_p = pltpu.bitcast(pltpu.prng_random_bits((R, 128)), jnp.uint32)[:, 0:1]
    o_ref[:, 0:1] = jnp.where(
        bits_p >= thresh, pos_ref[...] * scale,
        jnp.float32(0.0)).astype(o_ref.dtype)


def _dropout_bits_kernel(bits_ref, pos_ref, x_ref, o_ref, *, dropout_p):
    """Training path fallback (interpret / non-TPU lowering): pltpu.prng_* has
    no CPU rule, so pre-generated jax.random bits are streamed in instead."""
    thresh = _dropout_thresh(dropout_p)
    scale = jnp.float32(1.0 / (1.0 - dropout_p))
    bits = bits_ref[...]
    o_ref[:, 1:] = jnp.where(
        bits[:, 1:] >= thresh, x_ref[...].astype(jnp.float32) * scale,
        jnp.float32(0.0)).astype(o_ref.dtype)
    o_ref[:, 0:1] = jnp.where(
        bits[:, 0:1] >= thresh, pos_ref[...] * scale,
        jnp.float32(0.0)).astype(o_ref.dtype)


# ------------------------------ tiling policy --------------------------------


def _pick_block_rows(rows, embed, itemsize, with_dropout, num_tc):
    """Pick a row-tile size.

    * Sublane-aligned to the dtype packing factor (8 f32 / 16 bf16 / 32 int8)
      so x / output tiles use fully packed vregs.
    * VMEM budget ~8 MiB of double-buffered x+out (+pos) for the bandwidth
      path -- under the 16 MiB v5e default scoped limit, well under v6e/v7x's
      32 MiB scoped defaults -- shrunk to ~4 MiB in training so the tile-sized
      uint32 PRNG-bits buffer keeps a bounded live range.
    * No forced multi-step split on single-TC chips (v5e/v6e); on v7x the step
      count is rounded to an even number so both TensorCores get equal work
      (best-effort; a tiny tail block at the boundary is acceptable).
    """
    packing = max(1, 4 // max(1, itemsize))
    sub = 8 * packing                                     # sublane alignment
    per_row = (embed + (embed + 1)) * itemsize * 2        # x + out, double-buffered
    per_row += 2 * 128 * 4                                # pos column (lane-padded), x2
    if with_dropout:
        per_row += (embed + 1) * 4 * 2                    # PRNG bits (hw live / streamed)
    budget = (4 << 20) if with_dropout else (8 << 20)
    br = max(sub, (budget // per_row) // sub * sub)
    if num_tc >= 2 and rows > sub:
        steps = max(2, -(-rows // br))
        if steps % 2:
            steps += 1                                    # even split across 2 TCs
        br = -(-rows // steps)
        br = max(sub, -(-br // sub) * sub)
    if br >= rows:
        return rows                                       # full extent is always legal
    return br


# --------------------------------- wrapper -----------------------------------


def index_pos_encoder(x, *, max_seq_len=5000, dropout_p=0.1, training=False,
                      seed=0, block_rows=None, force_pallas=False):
    """x: [seq_len, batch, embed]  ->  [seq_len, batch, embed + 1]"""
    S, B, E = x.shape
    rows = S * B
    with_dropout = bool(training) and float(dropout_p) > 0.0

    # Small-E eval fast path: masked 1-lane stores + the +1 lane shift dominate
    # the Pallas kernel for tiny embed dims; a plain concat is fused by XLA.
    if not force_pallas and not with_dropout and E < 128:
        pos = (jnp.arange(S, dtype=jnp.float32) / jnp.float32(max_seq_len))[:, None, None]
        pe = jnp.broadcast_to(pos, (S, B, 1)).astype(x.dtype)
        return jnp.concatenate([pe, x], axis=2)

    # Flatten to a sublane-dense 2-D layout (free reshape for contiguous x).
    x2 = x.reshape(rows, E)

    # Exact f32 positional column, matching torch: arange(S) / max_seq_len,
    # broadcast over batch. Tiny side input (rows * 4 bytes of HBM traffic).
    pos = jnp.arange(S, dtype=jnp.float32) / jnp.float32(max_seq_len)
    pos2 = jnp.broadcast_to(pos[:, None], (S, B)).reshape(rows, 1)

    itemsize = jnp.dtype(x.dtype).itemsize
    num_tc = _num_tensorcores()
    if block_rows is None:
        block_rows = _pick_block_rows(rows, E, itemsize, with_dropout, num_tc)
    grid = (pl.cdiv(rows, block_rows),)

    pos_spec = pl.BlockSpec((block_rows, 1), lambda i: (i, 0))
    x_spec = pl.BlockSpec((block_rows, E), lambda i: (i, 0))
    out_spec = pl.BlockSpec((block_rows, E + 1), lambda i: (i, 0))

    bytes_accessed = rows * E * itemsize + rows * 4 + rows * (E + 1) * itemsize

    if not with_dropout:
        kernel = _eval_kernel
        in_specs = [pos_spec, x_spec]
        inputs = (pos2, x2)
    elif _tpu_backend():
        kernel = functools.partial(_dropout_hw_kernel, dropout_p=float(dropout_p))
        in_specs = [pl.BlockSpec(memory_space=pltpu.SMEM), pos_spec, x_spec]
        inputs = (jnp.array([seed], dtype=jnp.int32), pos2, x2)
    else:
        # TODO(synk): non-TPU / interpret fallback — the TPU hardware PRNG has
        # no CPU lowering, so dropout bits are generated here and streamed in.
        bits = jax.random.bits(jax.random.PRNGKey(seed), (rows, E + 1), dtype=jnp.uint32)
        kernel = functools.partial(_dropout_bits_kernel, dropout_p=float(dropout_p))
        in_specs = [pl.BlockSpec((block_rows, E + 1), lambda i: (i, 0)), pos_spec, x_spec]
        inputs = (bits, pos2, x2)
        bytes_accessed += rows * (E + 1) * 4

    out2 = pl.pallas_call(
        kernel,
        out_shape=jax.ShapeDtypeStruct((rows, E + 1), x.dtype),
        grid=grid,
        in_specs=in_specs,
        out_specs=out_spec,
        compiler_params=pltpu.CompilerParams(dimension_semantics=("parallel",)),
        cost_estimate=pl.CostEstimate(flops=0, transcendentals=0,
                                      bytes_accessed=int(bytes_accessed)),
    )(*inputs)

    return out2.reshape(S, B, E + 1)


# ----------------------------------- demo ------------------------------------


if __name__ == "__main__":
    # Small shapes consistent with the module's forward: [seq_len, batch, d_model].
    S, B, E = 8, 2, 128
    MAX_SEQ_LEN = 5000

    key = jax.random.PRNGKey(0)
    x = jax.random.normal(key, (S, B, E), dtype=jnp.float32)

    # Eval-mode forward through the Pallas kernel (dropout is identity).
    out = index_pos_encoder(x, max_seq_len=MAX_SEQ_LEN, dropout_p=0.1, training=False)
    out = jax.block_until_ready(out)

    # Pure-JAX reference of the PyTorch forward (eval mode).
    pos_ref = (jnp.arange(S, dtype=jnp.float32) / MAX_SEQ_LEN)[:, None, None]   # [S,1,1]
    ref = jnp.concatenate([jnp.broadcast_to(pos_ref, (S, B, 1)), x], axis=2)

    assert out.shape == (S, B, E + 1), out.shape
    assert out.dtype == x.dtype
    assert jnp.allclose(out, ref, atol=1e-6, rtol=1e-6), float(jnp.max(jnp.abs(out - ref)))

    # Small-E eval fast path (plain XLA concat) still matches the reference.
    E_small = 32
    x_s = jax.random.normal(jax.random.PRNGKey(1), (S, B, E_small), dtype=jnp.float32)
    out_s = jax.block_until_ready(
        index_pos_encoder(x_s, max_seq_len=MAX_SEQ_LEN, dropout_p=0.1, training=False))
    ref_s = jnp.concatenate([jnp.broadcast_to(pos_ref, (S, B, 1)), x_s], axis=2)
    assert out_s.shape == (S, B, E_small + 1)
    assert jnp.allclose(out_s, ref_s, atol=1e-6, rtol=1e-6)

    # Training-mode smoke test: every element is either dropped (0) or scaled by 1/(1-p).
    p = 0.1
    out_t = jax.block_until_ready(
        index_pos_encoder(x, max_seq_len=MAX_SEQ_LEN, dropout_p=p,
                          training=True, seed=123))
    assert out_t.shape == (S, B, E + 1)
    scaled = ref / (1.0 - p)
    ok = jnp.isclose(out_t, 0.0, atol=1e-8) | jnp.isclose(out_t, scaled, rtol=1e-5, atol=1e-6)
    assert bool(jnp.all(ok))

    print("KERNEL_OK")
</pallas_src>

<mosaic_0001>
module attributes {stable_mosaic.version = 11 : i64} {
  func.func @_eval_kernel(%arg0: i32, %arg1: memref<16x1xf32, #tpu.memory_space<vmem>>, %arg2: memref<16x128xf32, #tpu.memory_space<vmem>>, %arg3: memref<16x129xf32, #tpu.memory_space<vmem>>) attributes {dimension_semantics = [#tpu.dimension_semantics<parallel>], iteration_bounds = array<i64: 1>, scalar_prefetch = 0 : i64, scratch_operands = 0 : i64, tpu.core_type = #tpu.core_type<tc>, window_params = [{transform_indices = @transform_0, window_bounds = array<i64: 16, 1>}, {transform_indices = @transform_1, window_bounds = array<i64: 16, 128>}, {transform_indices = @transform_2, window_bounds = array<i64: 16, 129>}]} {
    %c0 = arith.constant 0 : index
    %c0_0 = arith.constant 0 : index
    %0 = vector.load %arg2[%c0, %c0_0] : memref<16x128xf32, #tpu.memory_space<vmem>>, vector<16x128xf32>
    %c0_1 = arith.constant 0 : index
    %c1 = arith.constant 1 : index
    %1 = vector.load %arg3[%c0_1, %c1] : memref<16x129xf32, #tpu.memory_space<vmem>>, vector<16x128xf32>
    tpu.vector_store %arg3[%c0_1, %c1], %0 {strides = array<i32>} : memref<16x129xf32, #tpu.memory_space<vmem>>, vector<16x128xf32>,
    %c0_2 = arith.constant 0 : index
    %c0_3 = arith.constant 0 : index
    %2 = vector.load %arg1[%c0_2, %c0_3] : memref<16x1xf32, #tpu.memory_space<vmem>>, vector<16x1xf32>
    %c0_4 = arith.constant 0 : index
    %c0_5 = arith.constant 0 : index
    %3 = vector.load %arg3[%c0_4, %c0_5] : memref<16x129xf32, #tpu.memory_space<vmem>>, vector<16x1xf32>
    tpu.vector_store %arg3[%c0_4, %c0_5], %2 {strides = array<i32>} : memref<16x129xf32, #tpu.memory_space<vmem>>, vector<16x1xf32>,
    return
  }
  func.func @transform_0(%arg0: i32) -> (i32, i32) {
    %c0_i32 = arith.constant 0 : i32
    %c0_i32_0 = arith.constant 0 : i32
    return %arg0, %c0_i32 : i32, i32
  }
  func.func @transform_1(%arg0: i32) -> (i32, i32) {
    %c0_i32 = arith.constant 0 : i32
    %c0_i32_0 = arith.constant 0 : i32
    return %arg0, %c0_i32 : i32, i32
  }
  func.func @transform_2(%arg0: i32) -> (i32, i32) {
    %c0_i32 = arith.constant 0 : i32
    %c0_i32_0 = arith.constant 0 : i32
    return %arg0, %c0_i32 : i32, i32
  }
}

</mosaic_0001>

<llo_original>
// kernel: tpu_custom_call.1
$region0: #{tpu_custom_call.1}
  #allocation0 [shape = 'u32[]', space=smem, size = 0x4, offset = 0x4, fixed_abs, tag = 'smem constant byte address 0x4 - core index']
  #allocation1 [shape = 'u32[144,128]{1,0:T(1,128)}', space=vmem, size = 0x12000, scoped, tag = 'internal scratch']
  %s0 = inlined_call_operand.vmem [shape: f32[16,1], index: 0, kind: input, shape index: {}]
  %s1 = inlined_call_operand.vmem [shape: f32[16,128], index: 1, kind: input, shape index: {}]
  %s2 = inlined_call_operand.hbm [shape: f32[16,129], index: 2, kind: output, shape index: {}]
  %s3 = sld [smem:[#allocation0]]
  $region18: #{tpu_custom_call.1} parent=0
    _
  %s5 = ssub.s32 1, %s3
  %s6 = scalar_select 0, %s5, %s3
  $region1: #{tpu_custom_call.1} parent=0
    #allocation2 [shape = 'u8[16384]{0}', space=vmem, size = 0x4000, scoped, tag = 'output window, operand 0, single buffered']
    #allocation3 [shape = 's32[1]{0}', space=sflag, size = 0x4, scoped, tag = 'scoped memory for tpu_custom_call.1']
    %7 = vsyncpa [#allocation3], 0
    // Predicated region
    $region2: #{tpu_custom_call.1} parent=1 // pred_check
      _
    $region3: #{tpu_custom_call.1} parent=1 // pred_check_branch
      %9 = sbr.rel (0) target = $region5
    $region4: #{tpu_custom_call.1} parent=1 // pred_region
      _
    $region5: #{tpu_custom_call.1} parent=1 // pred_fallthru
      _
    // Predicated region
    $region6: #{tpu_custom_call.1} parent=1 // pred_check
      _
    $region7: #{tpu_custom_call.1} parent=1 // pred_check_branch
      %11 = sbr.rel (0) target = $region9
    $region8: #{tpu_custom_call.1} parent=1 // pred_region
      _
    $region9: #{tpu_custom_call.1} parent=1 // pred_fallthru
      _
    %v12 = vld [vmem:[%s1] sm:$0xff]
    %v13 = vld [vmem:[%s1 + $0x8] sm:$0xff]
    %16 = vrot.lane.b32.xlu0 %v12, 1
    %v17 = vpop.permute.xlu0 %16
    %18 = vrot.lane.b32.xlu0 %v13, 1
    %v19 = vpop.permute.xlu0 %18
    %vm22 = vcmask 1047560
    %23 = vst.msk [vmem:[#allocation2] sm:$0xff] %vm22, %v17
    %vm24 = vcmask 7168
    %25 = vst.msk [vmem:[#allocation2 + $0x8] sm:$0xff] %vm24, %v17
    %26 = vst.msk [vmem:[#allocation2 + $0x10] sm:$0xff] %vm22, %v19
    %27 = vst.msk [vmem:[#allocation2 + $0x18] sm:$0xff] %vm24, %v19
    %v28 = vld [vmem:[%s0] sm:$0xff]
    %v29 = vld [vmem:[%s0 + $0x8] sm:$0xff]
    %30 = vst.msk [vmem:[#allocation2] sm:$0xff] %vm24, %v28
    %31 = vst.msk [vmem:[#allocation2 + $0x10] sm:$0xff] %vm24, %v29
    // Predicated region
    $region10: #{tpu_custom_call.1} parent=1 // pred_check
      _
    $region11: #{tpu_custom_call.1} parent=1 // pred_check_branch
      %33 = sbr.rel (0) target = $region13
    $region12: #{tpu_custom_call.1} parent=1 // pred_region
      %s35 = ssub.s32 512, 512
      %36 = vsyncadd [#allocation3], %s35
      %s37 = sshll.u32 [#allocation2], 4
      %s38 = int_to_ptr.vmem [resolvable:$true] %s37
      %43 = dma.vmem_to_hbm [thread:$0]  %s38, 512, %s2, [#allocation3], 256, 256, 16
    $region13: #{tpu_custom_call.1} parent=1 // pred_fallthru
      _
    // Predicated region
    $region14: #{tpu_custom_call.1} parent=1 // pred_check
      _
    $region15: #{tpu_custom_call.1} parent=1 // pred_check_branch
      %45 = sbr.rel (0) target = $region17
    $region16: #{tpu_custom_call.1} parent=1 // pred_region
      %46 = dma.done [#allocation3], 512
    $region17: #{tpu_custom_call.1} parent=1 // pred_fallthru
      _
    %47 = vsyncpa [#allocation3], 1

</llo_original>
